<compile_context>
chip_gen: v7x
topology: tpu7x:2x2x1
jax: 0.10.0
libtpu: 0.0.40
codegen_flags: <defaults>
</compile_context>

<pallas_src>
import functools
import math

import jax
import jax.numpy as jnp
from jax.experimental import pallas as pl
from jax.experimental.pallas import tpu as pltpu

ALPHA = 0.25
GAMMA = 2.0


def _focal_kernel(p_ref, t_ref, s_ref, *rest, alpha, gamma, gamma_is_two,
                  binary_targets, use_expand, tile_rows, rows_total,
                  steps_per_split):
    if use_expand:
        e_ref, loss_ref, npos_ref = rest
    else:
        loss_ref, npos_ref = rest

    sp = pl.program_id(0)            # split (megacore candidate on v7x)
    i = pl.program_id(1)             # sequential step within the split

    # Output blocks are the accumulators (same block index for every i of a
    # split -> resident in VMEM across the whole split).
    @pl.when(i == 0)
    def _():
        loss_ref[...] = jnp.zeros_like(loss_ref)
        npos_ref[...] = jnp.zeros_like(npos_ref)

    # Native-dtype inputs streamed from HBM, upcast in-kernel.
    p = jnp.clip(p_ref[...].astype(jnp.float32), 1e-05, 0.99999)
    t = t_ref[...].astype(jnp.float32)
    s = s_ref[...].astype(jnp.int32)                         # (TR, k)

    # Row-validity mask for the ragged tail / over-provisioned split.
    step = sp * steps_per_split + i
    row = step * tile_rows + jax.lax.broadcasted_iota(
        jnp.int32, (tile_rows, 1), 0)
    row_ok = row < rows_total                                # (TR, 1)

    valid = jnp.logical_and(row_ok, s != -1)                 # (TR, k) bool
    pos = jnp.logical_and(row_ok, s == 1)                    # (TR, k) bool

    if use_expand:
        # Expand per-anchor validity to the k*C lane layout with a tiny
        # constant matmul on the otherwise-idle MXU.
        valid_lanes = jnp.dot(valid.astype(jnp.float32), e_ref[...],
                              preferred_element_type=jnp.float32) > 0.5
    else:
        # k == 1: one anchor per row, plain lane broadcast is free.
        valid_lanes = valid                                  # (TR, 1)

    # Shared (t == 1) mask drives all three selects.
    is_one = (t == 1.0)
    alpha_factor = jnp.where(is_one, alpha, 1.0 - alpha)
    fb = jnp.where(is_one, 1.0 - p, p)
    if binary_targets:
        # Single-log BCE: valid only when targets are exactly 0/1.
        bce = -jnp.log(jnp.where(is_one, p, 1.0 - p))
    else:
        # Two-log form so soft targets match the reference exactly.
        bce = -(t * jnp.log(p) + (1.0 - t) * jnp.log(1.0 - p))
    if gamma_is_two:
        focal_weight = alpha_factor * (fb * fb)
    else:
        focal_weight = alpha_factor * (fb ** gamma)

    # Select (not multiply) so garbage lanes from partial tiles can never leak
    # NaN/Inf into the sum.
    loss = jnp.where(valid_lanes, focal_weight * bce, 0.0)

    # Sublane-aligned partial reduce (pure VPU adds) into the output blocks;
    # the cross-lane reduction happens once, in plain JAX, on tiny arrays.
    loss_ref[...] += jnp.sum(loss.reshape(tile_rows // 8, 8, -1), axis=0)
    npos_ref[...] += jnp.sum(
        pos.astype(jnp.float32).reshape(tile_rows // 8, 8, -1), axis=0)


def _chip_info():
    """Best-effort (vmem_bytes, num_tensorcores) for the local TPU."""
    vmem = 128 * 1024 * 1024
    cores = 1
    try:
        kind = jax.devices()[0].device_kind.lower()
    except Exception:
        kind = ""
    if "v7" in kind:
        vmem = 64 * 1024 * 1024
        cores = 2
    try:
        vmem = int(pltpu.get_tpu_info().vmem_capacity_bytes)
    except Exception:
        pass
    return vmem, cores


def detection_focal_loss(cls_inputs, cls_targets, anchor_states,
                         alpha=ALPHA, gamma=GAMMA, tile_rows=None,
                         num_splits=None, binary_targets=False,
                         use_core_parallel=False):
    """Pallas implementation of DetectionFocalLoss.forward.

    cls_inputs, cls_targets: (B, A, C) float (any float dtype)
    anchor_states:           (B, A) with values in {-1, 0, 1}

    Returns a scalar float32 loss.
    """
    B, A, C = cls_inputs.shape
    N = B * A

    # Fold anchors into lanes: smallest k with (k*C) % 128 == 0.
    k = 128 // math.gcd(C, 128)
    if k > 1 and N % k != 0:
        k = 1                        # lane-sparse fallback (block last dim == C)
    lane = k * C
    rows = N // k
    use_expand = k > 1

    p = cls_inputs.reshape(rows, lane)        # contiguous views: no HBM copies
    t = cls_targets.reshape(rows, lane)
    s = anchor_states.astype(jnp.int8).reshape(rows, k)

    vmem_bytes, n_cores = _chip_info()
    itemsize = max(jnp.dtype(cls_inputs.dtype).itemsize,
                   jnp.dtype(cls_targets.dtype).itemsize)
    # ~4 MiB per-input blocks on 128 MiB-VMEM chips, ~2 MiB on v7x (64 MiB).
    target_block_bytes = (2 << 20) if vmem_bytes <= (64 << 20) else (4 << 20)

    align = 32 if itemsize < 4 else 8         # native packing for sub-32-bit
    rows_cap = -(-rows // align) * align
    rows_budget = max(
        align, (target_block_bytes // (lane * itemsize)) // align * align)
    if tile_rows is None:
        tile_rows = rows_budget
    tile_rows = max(align, min(int(tile_rows), rows_budget, rows_cap))
    tile_rows = (tile_rows // align) * align

    total_steps = pl.cdiv(rows, tile_rows)
    if num_splits is None:
        num_splits = n_cores                  # 1 on v5e/v6e, 2 on v7x
    n_splits = int(num_splits) if total_steps >= int(num_splits) else 1
    steps_per_split = pl.cdiv(total_steps, n_splits)

    def data_map(splt, i):
        # Clamp so an over-provisioned split never requests a window that lies
        # entirely outside the array (its rows are masked out in-kernel).
        return (jnp.minimum(splt * steps_per_split + i, total_steps - 1), 0)

    in_specs = [pl.BlockSpec((tile_rows, lane), data_map),
                pl.BlockSpec((tile_rows, lane), data_map),
                pl.BlockSpec((tile_rows, k), data_map)]
    inputs = [p, t, s]
    if use_expand:
        # Constant expansion matrix: E[a, a*C:(a+1)*C] = 1.
        expand = jnp.repeat(jnp.eye(k, dtype=jnp.float32), C, axis=1)
        in_specs.append(pl.BlockSpec((k, lane), lambda splt, i: (0, 0)))
        inputs.append(expand)

    # Per-split accumulator outputs (8-sublane slabs, lane-shaped).
    out_shape = (jax.ShapeDtypeStruct((n_splits * 8, lane), jnp.float32),
                 jax.ShapeDtypeStruct((n_splits * 8, k), jnp.float32))
    out_specs = (pl.BlockSpec((8, lane), lambda splt, i: (splt, 0)),
                 pl.BlockSpec((8, k), lambda splt, i: (splt, 0)))

    # Explicit VMEM budget (v7x: 64 MiB physical / 32 MiB scoped default).
    lane_pad = -(-lane // 128) * 128
    need = 2 * tile_rows * lane_pad * jnp.dtype(cls_inputs.dtype).itemsize
    need += 2 * tile_rows * lane_pad * jnp.dtype(cls_targets.dtype).itemsize
    need += 2 * tile_rows * 128                       # int8 anchor-state block
    if use_expand:
        need += 2 * (-(-k // 8) * 8) * lane_pad * 4   # expand constant
    need += 4 * 8 * (lane_pad + 128) * 4              # output accumulators
    vmem_limit = int(min(vmem_bytes * 3 // 4, max(2 * need, 32 << 20)))

    # TODO(synk): verify on v7x that the leading "parallel" axis actually
    # shards across both TensorCores; if not, call with use_core_parallel=True.
    lead = pltpu.CORE_PARALLEL if use_core_parallel else "parallel"

    kernel = functools.partial(
        _focal_kernel, alpha=float(alpha), gamma=float(gamma),
        gamma_is_two=(float(gamma) == 2.0), binary_targets=bool(binary_targets),
        use_expand=use_expand, tile_rows=tile_rows, rows_total=rows,
        steps_per_split=steps_per_split)

    loss_parts, npos_parts = pl.pallas_call(
        kernel,
        out_shape=out_shape,
        grid_spec=pltpu.PrefetchScalarGridSpec(
            num_scalar_prefetch=0,
            grid=(n_splits, steps_per_split),
            in_specs=in_specs,
            out_specs=out_specs),
        compiler_params=pltpu.CompilerParams(
            dimension_semantics=(lead, "arbitrary"),
            vmem_limit_bytes=vmem_limit),
    )(*inputs)

    loss_sum = jnp.sum(loss_parts)
    num_pos = jnp.sum(npos_parts)
    normalizer = jnp.maximum(num_pos, 10.0)
    # TODO(synk): PyTorch returns None when every anchor is ignored; under jit
    # a data-dependent None is not expressible, so loss/normalizer (0 in that
    # case) is returned instead.
    return loss_sum / normalizer


def _reference(cls_inputs, cls_targets, anchor_states, alpha=ALPHA, gamma=GAMMA):
    """Pure-JAX reference mirroring the PyTorch forward."""
    mask = (anchor_states != -1).astype(jnp.float32)[..., None]
    p = jnp.clip(cls_inputs.astype(jnp.float32), 1e-05, 0.99999)
    t = cls_targets.astype(jnp.float32)
    bce = -(t * jnp.log(p) + (1.0 - t) * jnp.log(1.0 - p))
    alpha_factor = jnp.where(t == 1.0, alpha, 1.0 - alpha)
    focal_weight = alpha_factor * jnp.where(t == 1.0, 1.0 - p, p) ** gamma
    cls_loss = focal_weight * bce * mask
    normalizer = jnp.maximum(
        jnp.sum((anchor_states == 1).astype(jnp.float32)), 10.0)
    return jnp.sum(cls_loss) / normalizer


if __name__ == "__main__":
    key = jax.random.PRNGKey(0)

    # (B, A, C, forced tile_rows, num_splits, binary_targets)
    configs = [
        (2, 64, 8,  None, None, False),   # k=16 fold (lane=128), single step
        (2, 64, 80, 8,    2,    False),   # k=8 fold (lane=640), 2 steps, 2 splits
        (2, 64, 80, 8,    None, True),    # binary-target single-log fast path
        (2, 16, 6,  None, None, False),   # k=1 lane-sparse fallback path
    ]
    for idx, (B, A, C, tr, ns, bt) in enumerate(configs):
        k1, k2, k3, key = jax.random.split(key, 4)
        cls_inputs = jax.nn.sigmoid(jax.random.normal(k1, (B, A, C), jnp.float32))
        cls_targets = (jax.random.uniform(k2, (B, A, C)) > 0.8).astype(jnp.float32)
        anchor_states = jax.random.randint(k3, (B, A), -1, 2).astype(jnp.float32)

        fn = jax.jit(functools.partial(
            detection_focal_loss, tile_rows=tr, num_splits=ns,
            binary_targets=bt))
        loss = jax.block_until_ready(fn(cls_inputs, cls_targets, anchor_states))
        ref = _reference(cls_inputs, cls_targets, anchor_states)
        assert jnp.allclose(loss, ref, rtol=1e-5, atol=1e-6), (idx, loss, ref)

    print("KERNEL_OK")
</pallas_src>

<mosaic_0001>
module attributes {stable_mosaic.version = 11 : i64} {
  func.func @_focal_kernel(%arg0: i32, %arg1: i32, %arg2: memref<8x128xf32, #tpu.memory_space<vmem>>, %arg3: memref<8x128xf32, #tpu.memory_space<vmem>>, %arg4: memref<8x16xi8, #tpu.memory_space<vmem>>, %arg5: memref<16x128xf32, #tpu.memory_space<vmem>>, %arg6: memref<8x128xf32, #tpu.memory_space<vmem>>, %arg7: memref<8x16xf32, #tpu.memory_space<vmem>>) attributes {dimension_semantics = [#tpu.dimension_semantics<parallel>, #tpu.dimension_semantics<arbitrary>], iteration_bounds = array<i64: 1, 1>, scalar_prefetch = 0 : i64, scratch_operands = 0 : i64, tpu.core_type = #tpu.core_type<tc>, window_params = [{transform_indices = @transform_0, window_bounds = array<i64: 8, 128>}, {transform_indices = @transform_1, window_bounds = array<i64: 8, 128>}, {transform_indices = @transform_2, window_bounds = array<i64: 8, 16>}, {pipeline_mode = #tpu.pipeline_mode<synchronous>, transform_indices = @transform_3, window_bounds = array<i64: 16, 128>}, {transform_indices = @transform_4, window_bounds = array<i64: 8, 128>}, {transform_indices = @transform_5, window_bounds = array<i64: 8, 16>}]} {
    %c0_i32 = arith.constant 0 : i32
    %0 = arith.cmpi eq, %arg1, %c0_i32 : i32
    %1 = arith.extui %0 : i1 to i32
    %c0_i32_0 = arith.constant 0 : i32
    %2 = arith.cmpi ne, %1, %c0_i32_0 : i32
    scf.if %2 {
      %cst_31 = arith.constant 0.000000e+00 : f32
      %69 = vector.broadcast %cst_31 : f32 to vector<8x128xf32>
      %c0_32 = arith.constant 0 : index
      %c0_33 = arith.constant 0 : index
      %70 = vector.load %arg6[%c0_32, %c0_33] : memref<8x128xf32, #tpu.memory_space<vmem>>, vector<8x128xf32>
      tpu.vector_store %arg6[%c0_32, %c0_33], %69 {strides = array<i32>} : memref<8x128xf32, #tpu.memory_space<vmem>>, vector<8x128xf32>,
      %cst_34 = arith.constant 0.000000e+00 : f32
      %71 = vector.broadcast %cst_34 : f32 to vector<8x16xf32>
      %c0_35 = arith.constant 0 : index
      %c0_36 = arith.constant 0 : index
      %72 = vector.load %arg7[%c0_35, %c0_36] : memref<8x16xf32, #tpu.memory_space<vmem>>, vector<8x16xf32>
      tpu.vector_store %arg7[%c0_35, %c0_36], %71 {strides = array<i32>} : memref<8x16xf32, #tpu.memory_space<vmem>>, vector<8x16xf32>,
    } else {
    }
    %c0 = arith.constant 0 : index
    %c0_1 = arith.constant 0 : index
    %3 = vector.load %arg2[%c0, %c0_1] : memref<8x128xf32, #tpu.memory_space<vmem>>, vector<8x128xf32>
    %cst = arith.constant 9.99999974E-6 : f32
    %cst_2 = arith.constant 0.999989986 : f32
    %4 = vector.broadcast %cst : f32 to vector<8x128xf32>
    %5 = arith.maximumf %4, %3 : vector<8x128xf32>
    %6 = vector.broadcast %cst_2 : f32 to vector<8x128xf32>
    %7 = arith.minimumf %6, %5 : vector<8x128xf32>
    %c0_3 = arith.constant 0 : index
    %c0_4 = arith.constant 0 : index
    %8 = vector.load %arg3[%c0_3, %c0_4] : memref<8x128xf32, #tpu.memory_space<vmem>>, vector<8x128xf32>
    %c0_5 = arith.constant 0 : index
    %c0_6 = arith.constant 0 : index
    %9 = vector.load %arg4[%c0_5, %c0_6] : memref<8x16xi8, #tpu.memory_space<vmem>>, vector<8x16xi8>
    %10 = arith.extsi %9 : vector<8x16xi8> to vector<8x16xi32>
    %c1_i32 = arith.constant 1 : i32
    %11 = arith.muli %arg0, %c1_i32 : i32
    %12 = arith.addi %11, %arg1 : i32
    %c8_i32 = arith.constant 8 : i32
    %13 = arith.muli %12, %c8_i32 : i32
    %14 = tpu.iota {dimensions = array<i32: 0>} : vector<8x1xi32>
    %15 = vector.broadcast %13 : i32 to vector<8x1xi32>
    %16 = arith.addi %15, %14 : vector<8x1xi32>
    %c8_i32_7 = arith.constant 8 : i32
    %17 = vector.broadcast %c8_i32_7 : i32 to vector<8x1xi32>
    %18 = arith.cmpi slt, %16, %17 : vector<8x1xi32>
    %c-1_i32 = arith.constant -1 : i32
    %19 = vector.broadcast %c-1_i32 : i32 to vector<8x16xi32>
    %20 = arith.cmpi ne, %10, %19 : vector<8x16xi32>
    %21 = vector.broadcast %18 : vector<8x1xi1> to vector<8x16xi1>
    %22 = arith.andi %21, %20 : vector<8x16xi1>
    %c1_i32_8 = arith.constant 1 : i32
    %23 = vector.broadcast %c1_i32_8 : i32 to vector<8x16xi32>
    %24 = arith.cmpi eq, %10, %23 : vector<8x16xi32>
    %25 = vector.broadcast %18 : vector<8x1xi1> to vector<8x16xi1>
    %26 = arith.andi %25, %24 : vector<8x16xi1>
    %27 = arith.extui %22 : vector<8x16xi1> to vector<8x16xi32>
    %28 = arith.sitofp %27 : vector<8x16xi32> to vector<8x16xf32>
    %c0_9 = arith.constant 0 : index
    %c0_10 = arith.constant 0 : index
    %29 = vector.load %arg5[%c0_9, %c0_10] : memref<16x128xf32, #tpu.memory_space<vmem>>, vector<16x128xf32>
    %cst_11 = arith.constant dense<0.000000e+00> : vector<8x128xf32>
    %30 = tpu.matmul %28, %29, %cst_11 {dimension_numbers = #tpu.dot_dimension_numbers<[1], [0], [0], [1], [0, 0, 1, 1], [], []>} : vector<8x16xf32>, vector<16x128xf32>, vector<8x128xf32> -> vector<8x128xf32>
    %cst_12 = arith.constant 5.000000e-01 : f32
    %31 = vector.broadcast %cst_12 : f32 to vector<8x128xf32>
    %32 = arith.cmpf ogt, %30, %31 : vector<8x128xf32>
    %cst_13 = arith.constant 1.000000e+00 : f32
    %33 = vector.broadcast %cst_13 : f32 to vector<8x128xf32>
    %34 = arith.cmpf oeq, %8, %33 : vector<8x128xf32>
    %cst_14 = arith.constant 2.500000e-01 : f32
    %cst_15 = arith.constant 7.500000e-01 : f32
    %35 = vector.broadcast %cst_14 : f32 to vector<8x128xf32>
    %36 = vector.broadcast %cst_15 : f32 to vector<8x128xf32>
    %37 = arith.select %34, %35, %36 : vector<8x128xi1>, vector<8x128xf32>
    %cst_16 = arith.constant 1.000000e+00 : f32
    %38 = vector.broadcast %cst_16 : f32 to vector<8x128xf32>
    %39 = arith.subf %38, %7 : vector<8x128xf32>
    %40 = arith.select %34, %39, %7 : vector<8x128xi1>, vector<8x128xf32>
    %41 = math.log %7 : vector<8x128xf32>
    %42 = arith.mulf %8, %41 : vector<8x128xf32>
    %cst_17 = arith.constant 1.000000e+00 : f32
    %43 = vector.broadcast %cst_17 : f32 to vector<8x128xf32>
    %44 = arith.subf %43, %8 : vector<8x128xf32>
    %cst_18 = arith.constant 1.000000e+00 : f32
    %45 = vector.broadcast %cst_18 : f32 to vector<8x128xf32>
    %46 = arith.subf %45, %7 : vector<8x128xf32>
    %47 = math.log %46 : vector<8x128xf32>
    %48 = arith.mulf %44, %47 : vector<8x128xf32>
    %49 = arith.addf %42, %48 : vector<8x128xf32>
    %cst_19 = arith.constant 0.000000e+00 : f32
    %50 = vector.broadcast %cst_19 : f32 to vector<8x128xf32>
    %51 = arith.subf %50, %49 : vector<8x128xf32>
    %52 = arith.mulf %40, %40 : vector<8x128xf32>
    %53 = arith.mulf %37, %52 : vector<8x128xf32>
    %54 = arith.mulf %53, %51 : vector<8x128xf32>
    %cst_20 = arith.constant 0.000000e+00 : f32
    %55 = vector.broadcast %cst_20 : f32 to vector<8x128xf32>
    %56 = arith.select %32, %54, %55 : vector<8x128xi1>, vector<8x128xf32>
    %c0_21 = arith.constant 0 : index
    %c0_22 = arith.constant 0 : index
    %57 = vector.load %arg6[%c0_21, %c0_22] : memref<8x128xf32, #tpu.memory_space<vmem>>, vector<8x128xf32>
    %58 = vector.shape_cast %56 : vector<8x128xf32> to vector<1x8x128xf32>
    %cst_23 = arith.constant dense<0.000000e+00> : vector<8x128xf32>
    %59 = vector.multi_reduction <add>, %58, %cst_23 [0] : vector<1x8x128xf32> to vector<8x128xf32>
    %60 = arith.addf %57, %59 : vector<8x128xf32>
    %c0_24 = arith.constant 0 : index
    %c0_25 = arith.constant 0 : index
    %61 = vector.load %arg6[%c0_24, %c0_25] : memref<8x128xf32, #tpu.memory_space<vmem>>, vector<8x128xf32>
    tpu.vector_store %arg6[%c0_24, %c0_25], %60 {strides = array<i32>} : memref<8x128xf32, #tpu.memory_space<vmem>>, vector<8x128xf32>,
    %c0_26 = arith.constant 0 : index
    %c0_27 = arith.constant 0 : index
    %62 = vector.load %arg7[%c0_26, %c0_27] : memref<8x16xf32, #tpu.memory_space<vmem>>, vector<8x16xf32>
    %63 = arith.extui %26 : vector<8x16xi1> to vector<8x16xi32>
    %64 = arith.sitofp %63 : vector<8x16xi32> to vector<8x16xf32>
    %65 = vector.shape_cast %64 : vector<8x16xf32> to vector<1x8x16xf32>
    %cst_28 = arith.constant dense<0.000000e+00> : vector<8x16xf32>
    %66 = vector.multi_reduction <add>, %65, %cst_28 [0] : vector<1x8x16xf32> to vector<8x16xf32>
    %67 = arith.addf %62, %66 : vector<8x16xf32>
    %c0_29 = arith.constant 0 : index
    %c0_30 = arith.constant 0 : index
    %68 = vector.load %arg7[%c0_29, %c0_30] : memref<8x16xf32, #tpu.memory_space<vmem>>, vector<8x16xf32>
    tpu.vector_store %arg7[%c0_29, %c0_30], %67 {strides = array<i32>} : memref<8x16xf32, #tpu.memory_space<vmem>>, vector<8x16xf32>,
    return
  }
  func.func @transform_0(%arg0: i32, %arg1: i32) -> (i32, i32) {
    %c1_i32 = arith.constant 1 : i32
    %0 = arith.muli %arg0, %c1_i32 : i32
    %1 = arith.addi %0, %arg1 : i32
    %c0_i32 = arith.constant 0 : i32
    %2 = arith.minsi %1, %c0_i32 : i32
    %c0_i32_0 = arith.constant 0 : i32
    %c0_i32_1 = arith.constant 0 : i32
    return %2, %c0_i32_0 : i32, i32
  }
  func.func @transform_1(%arg0: i32, %arg1: i32) -> (i32, i32) {
    %c1_i32 = arith.constant 1 : i32
    %0 = arith.muli %arg0, %c1_i32 : i32
    %1 = arith.addi %0, %arg1 : i32
    %c0_i32 = arith.constant 0 : i32
    %2 = arith.minsi %1, %c0_i32 : i32
    %c0_i32_0 = arith.constant 0 : i32
    %c0_i32_1 = arith.constant 0 : i32
    return %2, %c0_i32_0 : i32, i32
  }
  func.func @transform_2(%arg0: i32, %arg1: i32) -> (i32, i32) {
    %c1_i32 = arith.constant 1 : i32
    %0 = arith.muli %arg0, %c1_i32 : i32
    %1 = arith.addi %0, %arg1 : i32
    %c0_i32 = arith.constant 0 : i32
    %2 = arith.minsi %1, %c0_i32 : i32
    %c0_i32_0 = arith.constant 0 : i32
    %c0_i32_1 = arith.constant 0 : i32
    return %2, %c0_i32_0 : i32, i32
  }
  func.func @transform_3(%arg0: i32, %arg1: i32) -> (i32, i32) {
    %c0_i32 = arith.constant 0 : i32
    %c0_i32_0 = arith.constant 0 : i32
    %c0_i32_1 = arith.constant 0 : i32
    return %c0_i32, %c0_i32_0 : i32, i32
  }
  func.func @transform_4(%arg0: i32, %arg1: i32) -> (i32, i32) {
    %c0_i32 = arith.constant 0 : i32
    %c0_i32_0 = arith.constant 0 : i32
    return %arg0, %c0_i32 : i32, i32
  }
  func.func @transform_5(%arg0: i32, %arg1: i32) -> (i32, i32) {
    %c0_i32 = arith.constant 0 : i32
    %c0_i32_0 = arith.constant 0 : i32
    return %arg0, %c0_i32 : i32, i32
  }
}

</mosaic_0001>

<llo_original>
// kernel: detection_focal_loss.1
$region0: #{detection_focal_loss.1}
  #allocation0 [shape = 'u32[]', space=smem, size = 0x4, offset = 0x4, fixed_abs, tag = 'smem constant byte address 0x4 - core index']
  #allocation1 [shape = 'u32[144,128]{1,0:T(1,128)}', space=vmem, size = 0x12000, scoped, tag = 'internal scratch']
  %s0 = inlined_call_operand.vmem [shape: f32[8,128], index: 0, kind: input, shape index: {}]
  %s1 = inlined_call_operand.vmem [shape: f32[8,128], index: 1, kind: input, shape index: {}]
  %s2 = inlined_call_operand.vmem [shape: s8[8,16], index: 2, kind: input, shape index: {}]
  %s3 = inlined_call_operand.vmem [shape: f32[16,128], index: 3, kind: input, shape index: {}]
  %s4 = inlined_call_operand.vmem [shape: f32[8,128], index: 4, kind: output, shape index: {0}]
  %s5 = inlined_call_operand.vmem [shape: f32[8,16], index: 5, kind: output, shape index: {1}]
  %6 = xla_tuple %s4, %s5
  %s7 = sld [smem:[#allocation0]]
  $region38: #{detection_focal_loss.1} parent=0
    _
  %s9 = ssub.s32 1, %s7
  %s10 = scalar_select 0, %s9, %s7
  // Predicated region
  $region2: #{detection_focal_loss.1} parent=0 // pred_check
    _
  $region3: #{detection_focal_loss.1} parent=0 // pred_check_branch
    %12 = sbr.rel (0) target = $region5
  $region4: #{detection_focal_loss.1} parent=0 // pred_region
    %s13 = sadd.s32 0, 0
    %p14 = scmp.lt.s32.totalorder %s13, 0
    %s15 = scalar_select %p14, %s13, 0
    %p16 = scmp.lt.s32.totalorder %s15, 0
    %s17 = scalar_select %p16, %s15, 0
    %s18 = smul.addr %s17, 8
    %s19 = scalar_lea.vmem %s0, %s18
    %s20 = sadd.s32 0, 0
    %p21 = scmp.lt.s32.totalorder %s20, 0
    %s22 = scalar_select %p21, %s20, 0
  $region5: #{detection_focal_loss.1} parent=0 // pred_fallthru
    _
  // Predicated region
  $region6: #{detection_focal_loss.1} parent=0 // pred_check
    _
  $region7: #{detection_focal_loss.1} parent=0 // pred_check_branch
    %24 = sbr.rel (0) target = $region9
  $region8: #{detection_focal_loss.1} parent=0 // pred_region
    %s25 = sadd.s32 0, 0
    %p26 = scmp.lt.s32.totalorder %s25, 0
    %s27 = scalar_select %p26, %s25, 0
    %p28 = scmp.lt.s32.totalorder %s27, 0
    %s29 = scalar_select %p28, %s27, 0
    %s30 = smul.addr %s29, 8
    %s31 = scalar_lea.vmem %s1, %s30
    %s32 = sadd.s32 0, 0
    %p33 = scmp.lt.s32.totalorder %s32, 0
    %s34 = scalar_select %p33, %s32, 0
  $region9: #{detection_focal_loss.1} parent=0 // pred_fallthru
    _
  // Predicated region
  $region10: #{detection_focal_loss.1} parent=0 // pred_check
    _
  $region11: #{detection_focal_loss.1} parent=0 // pred_check_branch
    %36 = sbr.rel (0) target = $region13
  $region12: #{detection_focal_loss.1} parent=0 // pred_region
    %s37 = sadd.s32 0, 0
    %p38 = scmp.lt.s32.totalorder %s37, 0
    %s39 = scalar_select %p38, %s37, 0
    %p40 = scmp.lt.s32.totalorder %s39, 0
    %s41 = scalar_select %p40, %s39, 0
    %s42 = smul.addr %s41, 2
    %s43 = scalar_lea.vmem %s2, %s42
    %s44 = sadd.s32 0, 0
    %p45 = scmp.lt.s32.totalorder %s44, 0
    %s46 = scalar_select %p45, %s44, 0
  $region13: #{detection_focal_loss.1} parent=0 // pred_fallthru
    _
  // Predicated region
  $region14: #{detection_focal_loss.1} parent=0 // pred_check
    _
  $region15: #{detection_focal_loss.1} parent=0 // pred_check_branch
    %48 = sbr.rel (0) target = $region17
  $region16: #{detection_focal_loss.1} parent=0 // pred_region
    _
  $region17: #{detection_focal_loss.1} parent=0 // pred_fallthru
    _
  %s49 = sadd.s32 0, 0
  %p50 = scmp.lt.s32.totalorder %s49, 0
  %s51 = scalar_select %p50, %s49, 0
  %p52 = scmp.lt.s32.totalorder %s51, 0
  %s53 = scalar_select %p52, %s51, 0
  %s54 = smul.addr %s53, 8
  %s55 = scalar_lea.vmem %s0, %s54
  %s56 = sadd.s32 0, 0
  %p57 = scmp.lt.s32.totalorder %s56, 0
  %s58 = scalar_select %p57, %s56, 0
  %p59 = scmp.lt.s32.totalorder %s58, 0
  %s60 = scalar_select %p59, %s58, 0
  %s61 = smul.addr %s60, 8
  %s62 = scalar_lea.vmem %s1, %s61
  %s63 = sadd.s32 0, 0
  %p64 = scmp.lt.s32.totalorder %s63, 0
  %s65 = scalar_select %p64, %s63, 0
  %p66 = scmp.lt.s32.totalorder %s65, 0
  %s67 = scalar_select %p66, %s65, 0
  %s68 = smul.addr %s67, 2
  %s69 = scalar_lea.vmem %s2, %s68
  %s70 = sadd.s32 0, 0
  %p71 = scmp.lt.s32.totalorder %s70, 0
  %s72 = scalar_select %p71, %s70, 0
  %p73 = scmp.lt.s32.totalorder %s72, 0
  %s74 = scalar_select %p73, %s72, 0
  %s75 = smul.addr %s74, 8
  %s76 = scalar_lea.vmem %s0, %s75
  %s77 = sadd.s32 0, 0
  %p78 = scmp.lt.s32.totalorder %s77, 0
  %s79 = scalar_select %p78, %s77, 0
  %s80 = sadd.s32 0, 0
  %p81 = scmp.lt.s32.totalorder %s80, 0
  %s82 = scalar_select %p81, %s80, 0
  %p83 = scmp.lt.s32.totalorder %s82, 0
  %s84 = scalar_select %p83, %s82, 0
  %s85 = smul.addr %s84, 8
  %s86 = scalar_lea.vmem %s1, %s85
  %s87 = sadd.s32 0, 0
  %p88 = scmp.lt.s32.totalorder %s87, 0
  %s89 = scalar_select %p88, %s87, 0
  %s90 = sadd.s32 0, 0
  %p91 = scmp.lt.s32.totalorder %s90, 0
  %s92 = scalar_select %p91, %s90, 0
  %p93 = scmp.lt.s32.totalorder %s92, 0
  %s94 = scalar_select %p93, %s92, 0
  %s95 = smul.addr %s94, 2
  %s96 = scalar_lea.vmem %s2, %s95
  %s97 = sadd.s32 0, 0
  %p98 = scmp.lt.s32.totalorder %s97, 0
  %s99 = scalar_select %p98, %s97, 0
  %p100 = scmp.eq.s32.totalorder 0, 0
  // Predicated region
  $region18: #{detection_focal_loss.1} parent=0 // pred_check
    %p101 = pneg %p100
  $region19: #{detection_focal_loss.1} parent=0 // pred_check_branch
    %103 = sbr.rel (%p101) target = $region21
  $region20: #{detection_focal_loss.1} parent=0 // pred_region
    %104 = vst [vmem:[%s4] sm:$0xff] 0.0
    %vm105 = vcmask 130048
    %106 = vst.msk [vmem:[%s5] sm:$0xff] %vm105, 0.0
  $region21: #{detection_focal_loss.1} parent=0 // pred_fallthru
    _
  %v107 = vld [vmem:[%s76] sm:$0xff]
  %v108 = vmax.f32 %v107, 1e-05
  %v109 = vmin.f32 %v108, 0.99999
  %v110 = vld [vmem:[%s86] sm:$0xff]
  %v111 = vld [vmem:[%s96] sm:$0x3]
  %v112 = vunpack.c.0.s8 %v111
  %s113 = sadd.s32 0, 0
  %s114 = smul.u32 %s113, 8
  %v115 = vlaneseq
  %v116 = vshrl.u32 %v115, 7
  %v117 = vstv %s114
  %v118 = vadd.s32 %v117, %v116
  %vm119 = vcmp.lt.s32.totalorder %v118, 8
  %vm120 = vcmp.ne.s32.totalorder %v112, 4294967295
  %v121 = vsel %vm119, 1, 0
  %vm122 = vcmp.eq.s32.totalorder %v121, 1
  %vm123 = vmand %vm122, %vm120
  %vm124 = vcmp.eq.s32.totalorder %v112, 1
  %vm125 = vmand %vm122, %vm124
  %v126 = vsel %vm123, 1, 0
  %v127 = vcvt.s32.f32 %v126
  %v128 = vld [vmem:[%s3] sm:$0xff]
  %v129 = vld [vmem:[%s3 + $0x8] sm:$0xff]
  %vm130 = vcmask 130048
  %v132 = vsel %vm130, %v127, 0
  %134 = vmatprep.subr.mxu0 0.0
  %135 = vmatpush1.msra.mxu0 %v128
  %136 = vmatprep.subr.mxu0 0.0
  %137 = vmatpush1.msra.mxu0 %v129
  %138 = vmatprep.subr.mxu0 0.0
  %139 = vmatpush1.msra.mxu0 0.0
  %140 = vmatprep.subr.mxu0 0.0
  %141 = vmatpush1.msra.mxu0 0.0
  %142 = vmatprep.subr.mxu0 0.0
  %143 = vmatpush1.msra.mxu0 0.0
  %144 = vmatprep.subr.mxu0 0.0
  %145 = vmatpush1.msra.mxu0 0.0
  %146 = vmatprep.subr.mxu0 0.0
  %147 = vmatpush1.msra.mxu0 0.0
  %148 = vmatprep.subr.mxu0 0.0
  %149 = vmatpush1.msra.mxu0 0.0
  %150 = vmatprep.subr.mxu0 0.0
  %151 = vmatpush1.msra.mxu0 0.0
  %152 = vmatprep.subr.mxu0 0.0
  %153 = vmatpush1.msra.mxu0 0.0
  %154 = vmatprep.subr.mxu0 0.0
  %155 = vmatpush1.msra.mxu0 0.0
  %156 = vmatprep.subr.mxu0 0.0
  %157 = vmatpush1.msra.mxu0 0.0
  %158 = vmatprep.subr.mxu0 0.0
  %159 = vmatpush1.msra.mxu0 0.0
  %160 = vmatprep.subr.mxu0 0.0
  %161 = vmatpush1.msra.mxu0 0.0
  %162 = vmatprep.subr.mxu0 0.0
  %163 = vmatpush1.msra.mxu0 0.0
  %164 = vmatprep.subr.mxu0 0.0
  %165 = vmatpush1.msra.mxu0 0.0
  %166 = vmatprep.subr.mxu0 0.0
  %167 = vmatpush1.msra.mxu0 0.0
  %168 = vmatprep.subr.mxu0 0.0
  %169 = vmatpush1.msra.mxu0 0.0
  %170 = vmatprep.subr.mxu0 0.0
  %171 = vmatpush1.msra.mxu0 0.0
  %172 = vmatprep.subr.mxu0 0.0
  %173 = vmatpush1.msra.mxu0 0.0
  %174 = vmatprep.subr.mxu0 0.0
  %175 = vmatpush1.msra.mxu0 0.0
  %176 = vmatprep.subr.mxu0 0.0
  %177 = vmatpush1.msra.mxu0 0.0
  %178 = vmatprep.subr.mxu0 0.0
  %179 = vmatpush1.msra.mxu0 0.0
  %180 = vmatprep.subr.mxu0 0.0
  %181 = vmatpush1.msra.mxu0 0.0
  %182 = vmatprep.subr.mxu0 0.0
  %183 = vmatpush1.msra.mxu0 0.0
  %184 = vmatprep.subr.mxu0 0.0
  %185 = vmatpush1.msra.mxu0 0.0
  %186 = vmatprep.subr.mxu0 0.0
  %187 = vmatpush1.msra.mxu0 0.0
  %188 = vmatprep.subr.mxu0 0.0
  %189 = vmatpush1.msra.mxu0 0.0
  %190 = vmatprep.subr.mxu0 0.0
  %191 = vmatpush1.msra.mxu0 0.0
  %192 = vmatprep.subr.mxu0 0.0
  %193 = vmatpush1.msra.mxu0 0.0
  %194 = vmatprep.subr.mxu0 0.0
  %195 = vmatpush1.msra.mxu0 0.0
  %196 = vmatprep.subr.mxu0 0.0
  %197 = vmatpush1.msra.mxu0 0.0
  %198 = vmatprep.mubr.f32.mxu0 0.0
  %199 = vmatmul.mubr.f32.gmra.mrb[0].mxu0 %v132
  %v200 = vpop.f32.mrb[0].mxu0
  %v201 = vadd.f32 0.0, %v200
  %v202 = vpop.f32.mrb[0].mxu0
  %203 = vdwg.mxu0
  %vm204 = vcmp.gt.f32.partialorder %v201, 0.5
  %vm205 = vcmp.eq.f32.partialorder %v110, 1.0
  %v206 = vsel %vm205, 0.25, 0.75
  %v207 = vsub.f32 1.0, %v109
  %v208 = vsel %vm205, %v207, %v109
  %v209 = vlog2.pop %v109
  %v210 = vmul.f32 %v209, 0.6931472
  %v211 = vmul.f32 %v110, %v210
  %v212 = vsub.f32 1.0, %v110
  %v213 = vlog2.pop %v207
  %v214 = vmul.f32 %v213, 0.6931472
  %v215 = vmul.f32 %v212, %v214
  %v216 = vadd.f32 %v211, %v215
  %v217 = vsub.f32 0.0, %v216
  %v218 = vmul.f32 %v208, %v208
  %v219 = vmul.f32 %v206, %v218
  %v220 = vmul.f32 %v219, %v217
  %v221 = vsel %vm204, %v220, 0.0
  %v222 = vld [vmem:[%s4] sm:$0xff]
  %v223 = vadd.f32 %v221, 0.0
  %v224 = vadd.f32 %v222, %v223
  %225 = vst [vmem:[%s4] sm:$0xff] %v224
  %v226 = vld [vmem:[%s5] sm:$0xff]
  %v227 = vsel %vm125, 1, 0
  %v228 = vcvt.s32.f32 %v227
  %v229 = vadd.f32 %v228, 0.0
  %v230 = vadd.f32 %v226, %v229
  %231 = vst.msk [vmem:[%s5] sm:$0xff] %vm130, %v230
  // Predicated region
  $region22: #{detection_focal_loss.1} parent=0 // pred_check
    _
  $region23: #{detection_focal_loss.1} parent=0 // pred_check_branch
    %233 = sbr.rel (0) target = $region25
  $region24: #{detection_focal_loss.1} parent=0 // pred_region
    _
  $region25: #{detection_focal_loss.1} parent=0 // pred_fallthru
    _
  // Predicated region
  $region26: #{detection_focal_loss.1} parent=0 // pred_check
    _
  $region27: #{detection_focal_loss.1} parent=0 // pred_check_branch
    %235 = sbr.rel (0) target = $region29
  $region28: #{detection_focal_loss.1} parent=0 // pred_region
    _
  $region29: #{detection_focal_loss.1} parent=0 // pred_fallthru
    _
  // Predicated region
  $region30: #{detection_focal_loss.1} parent=0 // pred_check
    _
  $region31: #{detection_focal_loss.1} parent=0 // pred_check_branch
    %237 = sbr.rel (0) target = $region33
  $region32: #{detection_focal_loss.1} parent=0 // pred_region
    _
  $region33: #{detection_focal_loss.1} parent=0 // pred_fallthru
    _
  // Predicated region
  $region34: #{detection_focal_loss.1} parent=0 // pred_check
    _
  $region35: #{detection_focal_loss.1} parent=0 // pred_check_branch
    %239 = sbr.rel (0) target = $region37
  $region36: #{detection_focal_loss.1} parent=0 // pred_region
    _
  $region37: #{detection_focal_loss.1} parent=0 // pred_fallthru
    _

</llo_original>
